<compile_context>
chip_gen: v7x
topology: tpu7x:2x2x1
jax: 0.10.0
libtpu: 0.0.40
codegen_flags: <defaults>
</compile_context>

<pallas_src>
import functools

import jax
import jax.numpy as jnp
from jax.experimental import pallas as pl
from jax.experimental.pallas import tpu as pltpu


def _ls_ce_kernel(eps, preds_ref, target_ref, mask_ref, loss_ref, msum_ref):
    j = pl.program_id(1)  # reduction ("arbitrary") axis within this parallel chunk

    @pl.when(j == 0)
    def _():
        loss_ref[...] = jnp.zeros_like(loss_ref)
        msum_ref[...] = jnp.zeros_like(msum_ref)

    x = preds_ref[...].astype(jnp.float32)   # (R, V) upcast per tile (bf16 stays bf16 in HBM)
    t = target_ref[...]                      # (R, 1) int32
    m = mask_ref[...].astype(jnp.float32)    # (R, 1)

    # log-softmax pieces along the vocab (lane) axis
    x_max = jnp.max(x, axis=-1, keepdims=True)
    xs = x - x_max
    sum_exp = jnp.sum(jnp.exp(xs), axis=-1, keepdims=True)

    # gather the target logit without materializing a one-hot f32 temp
    col = jax.lax.broadcasted_iota(jnp.int32, xs.shape, 1)
    picked_s = jnp.sum(jnp.where(col == t, xs, 0.0), axis=-1, keepdims=True)  # (R, 1)
    logp_t = picked_s - jnp.log(sum_exp)                                      # (R, 1)

    vocab = x.shape[-1]
    # exact semantics of `(1-eps)*one_hot + eps/V*one_hot` in the reference code
    scale = (1.0 - eps) + eps / float(vocab)
    per_row = (-scale) * logp_t * m                                           # (R, 1)

    block_loss = jnp.sum(per_row, axis=0, keepdims=True)   # (1, 1)
    block_mask = jnp.sum(m, axis=0, keepdims=True)         # (1, 1)

    loss_ref[...] += block_loss.reshape(1, 1, 1)
    msum_ref[...] += block_mask.reshape(1, 1, 1)


def _pick_row_tile(n_rows, vocab, preds_itemsize, num_chunks,
                   budget_bytes=20 * 1024 * 1024):
    """Pick a row tile from a VMEM working-set budget (conservative for v7x)."""
    # per-row estimate: double-buffered preds tile + ~3 f32-sized kernel temps
    # + (8,128)-padded narrow target/mask buffers (double-buffered).
    per_row = 2 * vocab * preds_itemsize + 12 * vocab + 2048
    rt = budget_bytes // per_row
    rt = int(max(8, min(1024, (rt // 8) * 8)))
    # never tile larger than one parallel chunk's share of the rows
    rows_per_chunk = -(-n_rows // num_chunks)            # ceil
    rows_per_chunk = ((rows_per_chunk + 7) // 8) * 8     # sublane multiple
    return int(min(rt, max(8, rows_per_chunk)))


def label_smoothed_cross_entropy(preds, target, mask=None, eps=0.1,
                                 row_tile=None, num_chunks=2):
    """preds: (B, S, V) float; target: (B, S) int; mask: (B, S) float (0 = masked)."""
    B, S, V = preds.shape
    if mask is None:
        mask = jnp.ones(target.shape, dtype=jnp.float32)

    N = B * S
    preds2 = preds.reshape(N, V)                       # keep native dtype in HBM
    target2 = target.reshape(N, 1).astype(jnp.int32)
    mask2 = mask.reshape(N, 1).astype(jnp.float32)

    if row_tile is None:
        row_tile = _pick_row_tile(N, V, preds.dtype.itemsize, num_chunks)

    chunk_rows = num_chunks * row_tile
    n_pad = ((N + chunk_rows - 1) // chunk_rows) * chunk_rows
    pad = n_pad - N
    if pad:  # padded rows carry mask == 0 -> contribute nothing
        preds2 = jnp.pad(preds2, ((0, pad), (0, 0)))
        target2 = jnp.pad(target2, ((0, pad), (0, 0)))
        mask2 = jnp.pad(mask2, ((0, pad), (0, 0)))

    T = n_pad // chunk_rows  # row tiles per parallel chunk

    loss_parts, mask_parts = pl.pallas_call(
        functools.partial(_ls_ce_kernel, eps),
        out_shape=(
            jax.ShapeDtypeStruct((num_chunks, 1, 1), jnp.float32),
            jax.ShapeDtypeStruct((num_chunks, 1, 1), jnp.float32),
        ),
        grid_spec=pltpu.PrefetchScalarGridSpec(
            num_scalar_prefetch=0,
            grid=(num_chunks, T),
            in_specs=[
                pl.BlockSpec((row_tile, V), lambda i, j: (i * T + j, 0)),
                pl.BlockSpec((row_tile, 1), lambda i, j: (i * T + j, 0)),
                pl.BlockSpec((row_tile, 1), lambda i, j: (i * T + j, 0)),
            ],
            out_specs=[
                pl.BlockSpec((1, 1, 1), lambda i, j: (i, 0, 0)),
                pl.BlockSpec((1, 1, 1), lambda i, j: (i, 0, 0)),
            ],
        ),
        compiler_params=pltpu.CompilerParams(
            dimension_semantics=("parallel", "arbitrary"),
            vmem_limit_bytes=48 * 1024 * 1024,
        ),
    )(preds2, target2, mask2)

    # final reduction + masked mean in plain JAX (tiny)
    return jnp.sum(loss_parts) / jnp.sum(mask_parts)


def _reference(preds, target, mask, eps=0.1):
    if mask is None:
        mask = jnp.ones(target.shape, dtype=jnp.float32)
    logp = jax.nn.log_softmax(preds.astype(jnp.float32), axis=-1)
    V = preds.shape[-1]
    oh = jax.nn.one_hot(target, V, dtype=jnp.float32)
    oh = (1.0 - eps) * oh + eps / V * oh
    loss = -(oh * logp).sum(-1)
    loss = loss * mask
    return loss.sum() / mask.sum()


if __name__ == "__main__":
    key = jax.random.PRNGKey(0)
    kp, kt, km = jax.random.split(key, 3)

    B, S, V = 2, 8, 128
    preds = jax.random.normal(kp, (B, S, V), dtype=jnp.float32)
    target = jax.random.randint(kt, (B, S), 0, V, dtype=jnp.int32)
    mask = (jax.random.uniform(km, (B, S)) > 0.3).astype(jnp.float32)
    mask = mask.at[0, 0].set(1.0)  # guarantee mask.sum() > 0

    loss = label_smoothed_cross_entropy(preds, target, mask, eps=0.1)
    loss = jax.block_until_ready(loss)

    ref = _reference(preds, target, mask, eps=0.1)
    assert jnp.allclose(loss, ref, atol=1e-5, rtol=1e-5), (loss, ref)
    print("KERNEL_OK")
</pallas_src>

<mosaic_0001>
module attributes {stable_mosaic.version = 11 : i64} {
  func.func @_ls_ce_kernel(%arg0: i32, %arg1: i32, %arg2: memref<8x128xf32, #tpu.memory_space<vmem>>, %arg3: memref<8x1xi32, #tpu.memory_space<vmem>>, %arg4: memref<8x1xf32, #tpu.memory_space<vmem>>, %arg5: memref<1x1x1xf32, #tpu.memory_space<vmem>>, %arg6: memref<1x1x1xf32, #tpu.memory_space<vmem>>) attributes {dimension_semantics = [#tpu.dimension_semantics<parallel>, #tpu.dimension_semantics<arbitrary>], iteration_bounds = array<i64: 2, 1>, scalar_prefetch = 0 : i64, scratch_operands = 0 : i64, tpu.core_type = #tpu.core_type<tc>, window_params = [{transform_indices = @transform_0, window_bounds = array<i64: 8, 128>}, {transform_indices = @transform_1, window_bounds = array<i64: 8, 1>}, {transform_indices = @transform_2, window_bounds = array<i64: 8, 1>}, {transform_indices = @transform_3, window_bounds = array<i64: 1, 1, 1>}, {transform_indices = @transform_4, window_bounds = array<i64: 1, 1, 1>}]} {
    %c0_i32 = arith.constant 0 : i32
    %0 = arith.cmpi eq, %arg1, %c0_i32 : i32
    %1 = arith.extui %0 : i1 to i32
    %c0_i32_0 = arith.constant 0 : i32
    %2 = arith.cmpi ne, %1, %c0_i32_0 : i32
    scf.if %2 {
      %cst_24 = arith.constant 0.000000e+00 : f32
      %37 = vector.broadcast %cst_24 : f32 to vector<1x1x1xf32>
      %c0_25 = arith.constant 0 : index
      %c0_26 = arith.constant 0 : index
      %c0_27 = arith.constant 0 : index
      %38 = vector.load %arg5[%c0_25, %c0_26, %c0_27] : memref<1x1x1xf32, #tpu.memory_space<vmem>>, vector<1x1x1xf32>
      tpu.vector_store %arg5[%c0_25, %c0_26, %c0_27], %37 {strides = array<i32>} : memref<1x1x1xf32, #tpu.memory_space<vmem>>, vector<1x1x1xf32>,
      %cst_28 = arith.constant 0.000000e+00 : f32
      %39 = vector.broadcast %cst_28 : f32 to vector<1x1x1xf32>
      %c0_29 = arith.constant 0 : index
      %c0_30 = arith.constant 0 : index
      %c0_31 = arith.constant 0 : index
      %40 = vector.load %arg6[%c0_29, %c0_30, %c0_31] : memref<1x1x1xf32, #tpu.memory_space<vmem>>, vector<1x1x1xf32>
      tpu.vector_store %arg6[%c0_29, %c0_30, %c0_31], %39 {strides = array<i32>} : memref<1x1x1xf32, #tpu.memory_space<vmem>>, vector<1x1x1xf32>,
    } else {
    }
    %c0 = arith.constant 0 : index
    %c0_1 = arith.constant 0 : index
    %3 = vector.load %arg2[%c0, %c0_1] : memref<8x128xf32, #tpu.memory_space<vmem>>, vector<8x128xf32>
    %c0_2 = arith.constant 0 : index
    %c0_3 = arith.constant 0 : index
    %4 = vector.load %arg3[%c0_2, %c0_3] : memref<8x1xi32, #tpu.memory_space<vmem>>, vector<8x1xi32>
    %c0_4 = arith.constant 0 : index
    %c0_5 = arith.constant 0 : index
    %5 = vector.load %arg4[%c0_4, %c0_5] : memref<8x1xf32, #tpu.memory_space<vmem>>, vector<8x1xf32>
    %cst = arith.constant dense<0xFF800000> : vector<8xf32>
    %6 = vector.multi_reduction <maximumf>, %3, %cst [1] : vector<8x128xf32> to vector<8xf32>
    %7 = vector.shape_cast %6 : vector<8xf32> to vector<8x1xf32>
    %8 = vector.broadcast %7 : vector<8x1xf32> to vector<8x128xf32>
    %9 = arith.subf %3, %8 : vector<8x128xf32>
    %10 = math.exp %9 : vector<8x128xf32>
    %cst_6 = arith.constant dense<0.000000e+00> : vector<8xf32>
    %11 = vector.multi_reduction <add>, %10, %cst_6 [1] : vector<8x128xf32> to vector<8xf32>
    %12 = vector.shape_cast %11 : vector<8xf32> to vector<8x1xf32>
    %13 = tpu.iota {dimensions = array<i32: 1>} : vector<8x128xi32>
    %14 = vector.broadcast %4 : vector<8x1xi32> to vector<8x128xi32>
    %15 = arith.cmpi eq, %13, %14 : vector<8x128xi32>
    %cst_7 = arith.constant 0.000000e+00 : f32
    %16 = vector.broadcast %cst_7 : f32 to vector<8x128xf32>
    %17 = arith.select %15, %9, %16 : vector<8x128xi1>, vector<8x128xf32>
    %cst_8 = arith.constant dense<0.000000e+00> : vector<8xf32>
    %18 = vector.multi_reduction <add>, %17, %cst_8 [1] : vector<8x128xf32> to vector<8xf32>
    %19 = vector.shape_cast %18 : vector<8xf32> to vector<8x1xf32>
    %20 = math.log %12 : vector<8x1xf32>
    %21 = arith.subf %19, %20 : vector<8x1xf32>
    %cst_9 = arith.constant -0.900781273 : f32
    %22 = vector.broadcast %cst_9 : f32 to vector<8x1xf32>
    %23 = arith.mulf %22, %21 : vector<8x1xf32>
    %24 = arith.mulf %23, %5 : vector<8x1xf32>
    %cst_10 = arith.constant dense<0.000000e+00> : vector<1xf32>
    %25 = vector.multi_reduction <add>, %24, %cst_10 [0] : vector<8x1xf32> to vector<1xf32>
    %26 = vector.shape_cast %25 : vector<1xf32> to vector<1x1xf32>
    %cst_11 = arith.constant dense<0.000000e+00> : vector<1xf32>
    %27 = vector.multi_reduction <add>, %5, %cst_11 [0] : vector<8x1xf32> to vector<1xf32>
    %28 = vector.shape_cast %27 : vector<1xf32> to vector<1x1xf32>
    %c0_12 = arith.constant 0 : index
    %c0_13 = arith.constant 0 : index
    %c0_14 = arith.constant 0 : index
    %29 = vector.load %arg5[%c0_12, %c0_13, %c0_14] : memref<1x1x1xf32, #tpu.memory_space<vmem>>, vector<1x1x1xf32>
    %30 = vector.shape_cast %26 : vector<1x1xf32> to vector<1x1x1xf32>
    %31 = arith.addf %29, %30 : vector<1x1x1xf32>
    %c0_15 = arith.constant 0 : index
    %c0_16 = arith.constant 0 : index
    %c0_17 = arith.constant 0 : index
    %32 = vector.load %arg5[%c0_15, %c0_16, %c0_17] : memref<1x1x1xf32, #tpu.memory_space<vmem>>, vector<1x1x1xf32>
    tpu.vector_store %arg5[%c0_15, %c0_16, %c0_17], %31 {strides = array<i32>} : memref<1x1x1xf32, #tpu.memory_space<vmem>>, vector<1x1x1xf32>,
    %c0_18 = arith.constant 0 : index
    %c0_19 = arith.constant 0 : index
    %c0_20 = arith.constant 0 : index
    %33 = vector.load %arg6[%c0_18, %c0_19, %c0_20] : memref<1x1x1xf32, #tpu.memory_space<vmem>>, vector<1x1x1xf32>
    %34 = vector.shape_cast %28 : vector<1x1xf32> to vector<1x1x1xf32>
    %35 = arith.addf %33, %34 : vector<1x1x1xf32>
    %c0_21 = arith.constant 0 : index
    %c0_22 = arith.constant 0 : index
    %c0_23 = arith.constant 0 : index
    %36 = vector.load %arg6[%c0_21, %c0_22, %c0_23] : memref<1x1x1xf32, #tpu.memory_space<vmem>>, vector<1x1x1xf32>
    tpu.vector_store %arg6[%c0_21, %c0_22, %c0_23], %35 {strides = array<i32>} : memref<1x1x1xf32, #tpu.memory_space<vmem>>, vector<1x1x1xf32>,
    return
  }
  func.func @transform_0(%arg0: i32, %arg1: i32) -> (i32, i32) {
    %c1_i32 = arith.constant 1 : i32
    %0 = arith.muli %arg0, %c1_i32 : i32
    %1 = arith.addi %0, %arg1 : i32
    %c0_i32 = arith.constant 0 : i32
    %c0_i32_0 = arith.constant 0 : i32
    return %1, %c0_i32 : i32, i32
  }
  func.func @transform_1(%arg0: i32, %arg1: i32) -> (i32, i32) {
    %c1_i32 = arith.constant 1 : i32
    %0 = arith.muli %arg0, %c1_i32 : i32
    %1 = arith.addi %0, %arg1 : i32
    %c0_i32 = arith.constant 0 : i32
    %c0_i32_0 = arith.constant 0 : i32
    return %1, %c0_i32 : i32, i32
  }
  func.func @transform_2(%arg0: i32, %arg1: i32) -> (i32, i32) {
    %c1_i32 = arith.constant 1 : i32
    %0 = arith.muli %arg0, %c1_i32 : i32
    %1 = arith.addi %0, %arg1 : i32
    %c0_i32 = arith.constant 0 : i32
    %c0_i32_0 = arith.constant 0 : i32
    return %1, %c0_i32 : i32, i32
  }
  func.func @transform_3(%arg0: i32, %arg1: i32) -> (i32, i32, i32) {
    %c0_i32 = arith.constant 0 : i32
    %c0_i32_0 = arith.constant 0 : i32
    %c0_i32_1 = arith.constant 0 : i32
    return %arg0, %c0_i32, %c0_i32_0 : i32, i32, i32
  }
  func.func @transform_4(%arg0: i32, %arg1: i32) -> (i32, i32, i32) {
    %c0_i32 = arith.constant 0 : i32
    %c0_i32_0 = arith.constant 0 : i32
    %c0_i32_1 = arith.constant 0 : i32
    return %arg0, %c0_i32, %c0_i32_0 : i32, i32, i32
  }
}

</mosaic_0001>

<llo_original>
// kernel: tpu_custom_call.1
$region0: #{tpu_custom_call.1}
  #allocation0 [shape = 'u32[]', space=smem, size = 0x4, offset = 0x4, fixed_abs, tag = 'smem constant byte address 0x4 - core index']
  #allocation1 [shape = 'u32[144,128]{1,0:T(1,128)}', space=vmem, size = 0x12000, scoped, tag = 'internal scratch']
  %s0 = inlined_call_operand.vmem [shape: f32[16,128], index: 0, kind: input, shape index: {}]
  %s1 = inlined_call_operand.vmem [shape: s32[16,1], index: 1, kind: input, shape index: {}]
  %s2 = inlined_call_operand.vmem [shape: f32[16,1], index: 2, kind: input, shape index: {}]
  %s3 = inlined_call_operand.vmem [shape: f32[2,1,1], index: 3, kind: output, shape index: {0}]
  %s4 = inlined_call_operand.vmem [shape: f32[2,1,1], index: 4, kind: output, shape index: {1}]
  %5 = xla_tuple %s3, %s4
  %s6 = sld [smem:[#allocation0]]
  $region57: #{tpu_custom_call.1} parent=0
    _
  %s8 = ssub.s32 1, %s6
  %s9 = scalar_select 0, %s8, %s6
  loop: start=0, step=1, limit=4
  $region2: #{tpu_custom_call.1} parent=0 // loop_pre_header
    _
  $region3: #{tpu_custom_call.1} parent=0 // loop_header
    %s11 = sphi 0, %s15
    %p12 = scmp.ge.s32.totalorder %s11, 4
    %s18 = sphi 0, %s30
    %s19 = sphi 0, %s26
    %s20 = sphi 0, %s18
    %s21 = sphi 0, %s19
    %s22 = sphi 0, %s20
    %s23 = sphi 0, %s21
    %s35 = sphi 0, %s37
    %s38 = sphi 0, %s35
    %s39 = sphi 0, %s38
    %s55 = sphi 0, %s39
    %s63 = sphi 0, %s65
    %s66 = sphi 0, %s63
    %s67 = sphi 0, %s66
    %s83 = sphi 0, %s67
    %s91 = sphi 0, %s93
    %s94 = sphi 0, %s91
    %s95 = sphi 0, %s94
    %s111 = sphi 0, %s95
    %s117 = sphi 0, %s119
    %s120 = sphi 0, %s117
    %s121 = sphi 0, %s120
    %s137 = sphi 0, %s121
    %s143 = sphi 0, %s145
    %s146 = sphi 0, %s143
    %s147 = sphi 0, %s146
    %s163 = sphi 0, %s147
  $region4: #{tpu_custom_call.1} parent=0 // loop_header_branch
    %14 = sbr.rel (%p12) target = $region8
  $region5: #{tpu_custom_call.1} parent=0 // loop_body
    %s16 = ssub.s32 %s11, 1
    %s17 = ssub.s32 %s11, 2
    %s24 = sadd.s32 1, %s19
    %p25 = scmp.ge.s32.totalorder %s24, 1
    %s26 = scalar_select %p25, 0, %s24
    %s27 = sadd.s32 1, %s18
    %s28 = scalar_select %p25, %s27, %s18
    %p29 = scmp.ge.s32.totalorder %s28, 2
    %s30 = scalar_select %p29, 0, %s28
    %s31 = sadd.s32 %s18, %s19
    %s32 = sadd.s32 %s30, %s26
    %s33 = ssub.s32 %s31, %s32
    %p34 = scmp.eq.s32.totalorder %s33, 0
    %s36 = sadd.s32 %s35, 1
    %s37 = scalar_select %p34, %s35, %s36
    %p40 = pneg %p34
    %p41 = scmp.eq.s32.totalorder %s11, 1
    %p42 = por %p40, %p41
    %p43 = scmp.ne.s32.totalorder %s35, %s38
    %p44 = scmp.eq.s32.totalorder %s11, 0
    %p45 = por %p43, %p44
    %p46 = scmp.ne.s32.totalorder %s35, %s38
    %p47 = scmp.eq.s32.totalorder %s16, 1
    %p48 = por %p46, %p47
    %p49 = scmp.ne.s32.totalorder %s38, %s39
    %p50 = scmp.eq.s32.totalorder %s16, 0
    %p51 = por %p49, %p50
    %p52 = scmp.ne.s32.totalorder %s38, %s39
    %p53 = scmp.eq.s32.totalorder %s17, 1
    %p54 = por %p52, %p53
    %p56 = scmp.ne.s32.totalorder %s39, %s55
    %p57 = scmp.eq.s32.totalorder %s17, 0
    %p58 = por %p56, %p57
    %s59 = sadd.s32 %s18, %s19
    %s60 = sadd.s32 %s30, %s26
    %s61 = ssub.s32 %s59, %s60
    %p62 = scmp.eq.s32.totalorder %s61, 0
    %s64 = sadd.s32 %s63, 1
    %s65 = scalar_select %p62, %s63, %s64
    %p68 = pneg %p62
    %p69 = scmp.eq.s32.totalorder %s11, 1
    %p70 = por %p68, %p69
    %p71 = scmp.ne.s32.totalorder %s63, %s66
    %p72 = scmp.eq.s32.totalorder %s11, 0
    %p73 = por %p71, %p72
    %p74 = scmp.ne.s32.totalorder %s63, %s66
    %p75 = scmp.eq.s32.totalorder %s16, 1
    %p76 = por %p74, %p75
    %p77 = scmp.ne.s32.totalorder %s66, %s67
    %p78 = scmp.eq.s32.totalorder %s16, 0
    %p79 = por %p77, %p78
    %p80 = scmp.ne.s32.totalorder %s66, %s67
    %p81 = scmp.eq.s32.totalorder %s17, 1
    %p82 = por %p80, %p81
    %p84 = scmp.ne.s32.totalorder %s67, %s83
    %p85 = scmp.eq.s32.totalorder %s17, 0
    %p86 = por %p84, %p85
    %s87 = sadd.s32 %s18, %s19
    %s88 = sadd.s32 %s30, %s26
    %s89 = ssub.s32 %s87, %s88
    %p90 = scmp.eq.s32.totalorder %s89, 0
    %s92 = sadd.s32 %s91, 1
    %s93 = scalar_select %p90, %s91, %s92
    %p96 = pneg %p90
    %p97 = scmp.eq.s32.totalorder %s11, 1
    %p98 = por %p96, %p97
    %p99 = scmp.ne.s32.totalorder %s91, %s94
    %p100 = scmp.eq.s32.totalorder %s11, 0
    %p101 = por %p99, %p100
    %p102 = scmp.ne.s32.totalorder %s91, %s94
    %p103 = scmp.eq.s32.totalorder %s16, 1
    %p104 = por %p102, %p103
    %p105 = scmp.ne.s32.totalorder %s94, %s95
    %p106 = scmp.eq.s32.totalorder %s16, 0
    %p107 = por %p105, %p106
    %p108 = scmp.ne.s32.totalorder %s94, %s95
    %p109 = scmp.eq.s32.totalorder %s17, 1
    %p110 = por %p108, %p109
    %p112 = scmp.ne.s32.totalorder %s95, %s111
    %p113 = scmp.eq.s32.totalorder %s17, 0
    %p114 = por %p112, %p113
    %s115 = ssub.s32 %s18, %s30
    %p116 = scmp.eq.s32.totalorder %s115, 0
    %s118 = sadd.s32 %s117, 1
    %s119 = scalar_select %p116, %s117, %s118
    %p122 = pneg %p116
    %p123 = scmp.eq.s32.totalorder %s11, 1
    %p124 = por %p122, %p123
    %p125 = scmp.ne.s32.totalorder %s117, %s120
    %p126 = scmp.eq.s32.totalorder %s11, 0
    %p127 = por %p125, %p126
    %p128 = scmp.ne.s32.totalorder %s117, %s120
    %p129 = scmp.eq.s32.totalorder %s16, 1
    %p130 = por %p128, %p129
    %p131 = scmp.ne.s32.totalorder %s120, %s121
    %p132 = scmp.eq.s32.totalorder %s16, 0
    %p133 = por %p131, %p132
    %p134 = scmp.ne.s32.totalorder %s120, %s121
    %p135 = scmp.eq.s32.totalorder %s17, 1
    %p136 = por %p134, %p135
    %p138 = scmp.ne.s32.totalorder %s121, %s137
    %p139 = scmp.eq.s32.totalorder %s17, 0
    %p140 = por %p138, %p139
    %s141 = ssub.s32 %s18, %s30
    %p142 = scmp.eq.s32.totalorder %s141, 0
    %s144 = sadd.s32 %s143, 1
    %s145 = scalar_select %p142, %s143, %s144
    %p148 = pneg %p142
    %p149 = scmp.eq.s32.totalorder %s11, 1
    %p150 = por %p148, %p149
    %p151 = scmp.ne.s32.totalorder %s143, %s146
    %p152 = scmp.eq.s32.totalorder %s11, 0
    %p153 = por %p151, %p152
    %p154 = scmp.ne.s32.totalorder %s143, %s146
    %p155 = scmp.eq.s32.totalorder %s16, 1
    %p156 = por %p154, %p155
    %p157 = scmp.ne.s32.totalorder %s146, %s147
    %p158 = scmp.eq.s32.totalorder %s16, 0
    %p159 = por %p157, %p158
    %p160 = scmp.ne.s32.totalorder %s146, %s147
    %p161 = scmp.eq.s32.totalorder %s17, 1
    %p162 = por %p160, %p161
    %p164 = scmp.ne.s32.totalorder %s147, %s163
    %p165 = scmp.eq.s32.totalorder %s17, 0
    %p166 = por %p164, %p165
    %p167 = scmp.le.s32.totalorder 1, %s11
    %p168 = scmp.lt.s32.totalorder %s11, 3
    %p169 = pnand %p167, %p168
    %p170 = pneg %p169
    // Predicated region
    $region9: #{tpu_custom_call.1} parent=5 // pred_check
      _
    $region10: #{tpu_custom_call.1} parent=5 // pred_check_branch
      %172 = sbr.rel (%p169) target = $region12
    $region11: #{tpu_custom_call.1} parent=5 // pred_region
      %s173 = ssub.s32 %s11, 1
    $region12: #{tpu_custom_call.1} parent=5 // pred_fallthru
      _
    %p174 = scmp.lt.s32.totalorder %s11, 2
    // Predicated region
    $region13: #{tpu_custom_call.1} parent=5 // pred_check
      %p175 = pneg %p174
    $region14: #{tpu_custom_call.1} parent=5 // pred_check_branch
      %177 = sbr.rel (%p175) target = $region16
    $region15: #{tpu_custom_call.1} parent=5 // pred_region
      // Predicated region
      $region17: #{tpu_custom_call.1} parent=15 // pred_check
        %p178 = pneg %p45
      $region18: #{tpu_custom_call.1} parent=15 // pred_check_branch
        %180 = sbr.rel (%p178) target = $region20
      $region19: #{tpu_custom_call.1} parent=15 // pred_region
        %s181 = sadd.s32 %s18, %s19
        %p182 = scmp.lt.s32.totalorder %s181, 1
        %s183 = scalar_select %p182, %s181, 1
        %s184 = smul.addr %s183, 8
        %s185 = scalar_lea.vmem %s0, %s184
        %s186 = sadd.s32 %s18, %s19
      $region20: #{tpu_custom_call.1} parent=15 // pred_fallthru
        _
      // Predicated region
      $region21: #{tpu_custom_call.1} parent=15 // pred_check
        %p187 = pneg %p73
      $region22: #{tpu_custom_call.1} parent=15 // pred_check_branch
        %189 = sbr.rel (%p187) target = $region24
      $region23: #{tpu_custom_call.1} parent=15 // pred_region
        %s190 = sadd.s32 %s18, %s19
        %p191 = scmp.lt.s32.totalorder %s190, 1
        %s192 = scalar_select %p191, %s190, 1
        %s193 = smul.addr %s192, 8
        %s194 = scalar_lea.vmem %s1, %s193
        %s195 = sadd.s32 %s18, %s19
      $region24: #{tpu_custom_call.1} parent=15 // pred_fallthru
        _
      // Predicated region
      $region25: #{tpu_custom_call.1} parent=15 // pred_check
        %p196 = pneg %p101
      $region26: #{tpu_custom_call.1} parent=15 // pred_check_branch
        %198 = sbr.rel (%p196) target = $region28
      $region27: #{tpu_custom_call.1} parent=15 // pred_region
        %s199 = sadd.s32 %s18, %s19
        %p200 = scmp.lt.s32.totalorder %s199, 1
        %s201 = scalar_select %p200, %s199, 1
        %s202 = smul.addr %s201, 8
        %s203 = scalar_lea.vmem %s2, %s202
        %s204 = sadd.s32 %s18, %s19
      $region28: #{tpu_custom_call.1} parent=15 // pred_fallthru
        _
    $region16: #{tpu_custom_call.1} parent=5 // pred_fallthru
      _
    %p205 = scmp.le.s32.totalorder 1, %s11
    %p206 = scmp.lt.s32.totalorder %s11, 3
    %p207 = pnand %p205, %p206
    %p208 = pneg %p207
    // Predicated region
    $region29: #{tpu_custom_call.1} parent=5 // pred_check
      _
    $region30: #{tpu_custom_call.1} parent=5 // pred_check_branch
      %210 = sbr.rel (%p207) target = $region32
    $region31: #{tpu_custom_call.1} parent=5 // pred_region
      %s211 = ssub.s32 %s11, 1
      %s212 = sadd.s32 %s20, %s21
      %p213 = scmp.lt.s32.totalorder %s212, 1
      %s214 = scalar_select %p213, %s212, 1
      %s215 = smul.addr %s214, 8
      %s216 = scalar_lea.vmem %s0, %s215
      %p217 = pneg %p51
      %p218 = pneg %p48
      %s219 = sadd.s32 %s20, %s21
      %p220 = scmp.lt.s32.totalorder %s219, 1
      %s221 = scalar_select %p220, %s219, 1
      %s222 = smul.addr %s221, 8
      %s223 = scalar_lea.vmem %s1, %s222
      %p224 = pneg %p79
      %p225 = pneg %p76
      %s226 = sadd.s32 %s20, %s21
      %p227 = scmp.lt.s32.totalorder %s226, 1
      %s228 = scalar_select %p227, %s226, 1
      %s229 = smul.addr %s228, 8
      %s230 = scalar_lea.vmem %s2, %s229
      %p231 = pneg %p107
      %p232 = pneg %p104
      %p233 = pneg %p133
      %p234 = pneg %p130
      %p235 = scmp.lt.s32.totalorder %s20, 1
      %s236 = scalar_select %p235, %s20, 1
      %s237 = scalar_lea.vmem %s3, %s236
      %p238 = pneg %p159
      %p239 = pneg %p156
      %p240 = scmp.lt.s32.totalorder %s20, 1
      %s241 = scalar_select %p240, %s20, 1
      %s242 = scalar_lea.vmem %s4, %s241
      %s243 = sadd.s32 %s20, %s21
      %p244 = scmp.lt.s32.totalorder %s243, 1
      %s245 = scalar_select %p244, %s243, 1
      %s246 = smul.addr %s245, 8
      %s247 = scalar_lea.vmem %s0, %s246
      %s248 = sadd.s32 %s20, %s21
      %s249 = sadd.s32 %s20, %s21
      %p250 = scmp.lt.s32.totalorder %s249, 1
      %s251 = scalar_select %p250, %s249, 1
      %s252 = smul.addr %s251, 8
      %s253 = scalar_lea.vmem %s1, %s252
      %s254 = sadd.s32 %s20, %s21
      %s255 = sadd.s32 %s20, %s21
      %p256 = scmp.lt.s32.totalorder %s255, 1
      %s257 = scalar_select %p256, %s255, 1
      %s258 = smul.addr %s257, 8
      %s259 = scalar_lea.vmem %s2, %s258
      %s260 = sadd.s32 %s20, %s21
      %p261 = scmp.lt.s32.totalorder %s20, 1
      %s262 = scalar_select %p261, %s20, 1
      %s263 = scalar_lea.vmem %s3, %s262
      %p264 = scmp.lt.s32.totalorder %s20, 1
      %s265 = scalar_select %p264, %s20, 1
      %s266 = scalar_lea.vmem %s4, %s265
      %p267 = scmp.eq.s32.totalorder %s21, 0
      // Predicated region
      $region33: #{tpu_custom_call.1} parent=31 // pred_check
        %p268 = pneg %p267
      $region34: #{tpu_custom_call.1} parent=31 // pred_check_branch
        %270 = sbr.rel (%p268) target = $region36
      $region35: #{tpu_custom_call.1} parent=31 // pred_region
        %vm271 = vcmask 0
        %272 = vst.msk [vmem:[%s263] sm:$0x1] %vm271, 0.0
        %273 = vst.msk [vmem:[%s266] sm:$0x1] %vm271, 0.0
      $region36: #{tpu_custom_call.1} parent=31 // pred_fallthru
        _
      %v274 = vld [vmem:[%s247] sm:$0xff]
      %v275 = vld [vmem:[%s253] sm:$0xff]
      %v276 = vld [vmem:[%s259] sm:$0xff]
      %277 = vmax.xlane.f32.xlu0 %v274
      %v278 = vpop.xlane.xlu0 %277
      %v279 = vsub.f32 %v274, %v278
      %v280 = vmul.f32 %v279, 1.442695
      %v281 = vpow.pop %v280
      %282 = vadd.xlane.f32.xlu0 %v281
      %v283 = vpop.xlane.xlu0 %282
      %v284 = vlaneseq
      %v285 = vand.u32 %v284, 127
      %286 = vset.pattern.permute.xlu0 0
      %287 = vperm.xlu0 %286, %v275
      %v288 = vpop.permute.xlu0 %287
      %vm289 = vcmp.eq.s32.totalorder %v285, %v288
      %v290 = vsel %vm289, %v279, 0.0
      %291 = vadd.xlane.f32.xlu0 %v290
      %v292 = vpop.xlane.xlu0 %291
      %v293 = vlog2.pop %v283
      %v294 = vmul.f32 %v293, 0.6931472
      %v295 = vsub.f32 %v292, %v294
      %v296 = vmul.f32 %v295, -0.9007813
      %v297 = vmul.f32 %v296, %v276
      %vm298 = vcmask 7168
      %v299 = vsel %vm298, %v297, 0.0
      %v300 = vrot.slane %v299, 4
      %v301 = vadd.f32 %v299, %v300
      %v302 = vrot.slane %v301, 2
      %v303 = vadd.f32 %v301, %v302
      %v304 = vrot.slane %v303, 1
      %v305 = vadd.f32 %v303, %v304
      %v306 = vsel %vm298, %v276, 0.0
      %v307 = vrot.slane %v306, 4
      %v308 = vadd.f32 %v306, %v307
      %v309 = vrot.slane %v308, 2
      %v310 = vadd.f32 %v308, %v309
      %v311 = vrot.slane %v310, 1
      %v312 = vadd.f32 %v310, %v311
      %v313 = vld [vmem:[%s263] sm:$0x1]
      %v314 = vadd.f32 %v313, %v305
      %vm315 = vcmask 0
      %316 = vst.msk [vmem:[%s263] sm:$0x1] %vm315, %v314
      %v317 = vld [vmem:[%s266] sm:$0x1]
      %v318 = vadd.f32 %v317, %v312
      %319 = vst.msk [vmem:[%s266] sm:$0x1] %vm315, %v318
      %p320 = scmp.lt.s32.totalorder %s20, 1
      %s321 = scalar_select %p320, %s20, 1
      %s322 = scalar_lea.vmem %s3, %s321
      %p323 = scmp.lt.s32.totalorder %s20, 1
      %s324 = scalar_select %p323, %s20, 1
      %s325 = scalar_lea.vmem %s4, %s324
      // Predicated region
      $region37: #{tpu_custom_call.1} parent=31 // pred_check
        %p326 = pneg %p130
      $region38: #{tpu_custom_call.1} parent=31 // pred_check_branch
        %328 = sbr.rel (%p326) target = $region40
      $region39: #{tpu_custom_call.1} parent=31 // pred_region
        _
      $region40: #{tpu_custom_call.1} parent=31 // pred_fallthru
        _
      // Predicated region
      $region41: #{tpu_custom_call.1} parent=31 // pred_check
        %p329 = pneg %p156
      $region42: #{tpu_custom_call.1} parent=31 // pred_check_branch
        %331 = sbr.rel (%p329) target = $region44
      $region43: #{tpu_custom_call.1} parent=31 // pred_region
        _
      $region44: #{tpu_custom_call.1} parent=31 // pred_fallthru
        _
    $region32: #{tpu_custom_call.1} parent=5 // pred_fallthru
      _
    %p332 = scmp.le.s32.totalorder 2, %s11
    // Predicated region
    $region45: #{tpu_custom_call.1} parent=5 // pred_check
      %p333 = pneg %p332
    $region46: #{tpu_custom_call.1} parent=5 // pred_check_branch
      %335 = sbr.rel (%p333) target = $region48
    $region47: #{tpu_custom_call.1} parent=5 // pred_region
      %s336 = ssub.s32 %s11, 2
      // Predicated region
      $region49: #{tpu_custom_call.1} parent=47 // pred_check
        %p337 = pneg %p136
      $region50: #{tpu_custom_call.1} parent=47 // pred_check_branch
        %339 = sbr.rel (%p337) target = $region52
      $region51: #{tpu_custom_call.1} parent=47 // pred_region
        %p340 = scmp.lt.s32.totalorder %s22, 1
        %s341 = scalar_select %p340, %s22, 1
        %s342 = scalar_lea.vmem %s3, %s341
      $region52: #{tpu_custom_call.1} parent=47 // pred_fallthru
        _
      // Predicated region
      $region53: #{tpu_custom_call.1} parent=47 // pred_check
        %p343 = pneg %p162
      $region54: #{tpu_custom_call.1} parent=47 // pred_check_branch
        %345 = sbr.rel (%p343) target = $region56
      $region55: #{tpu_custom_call.1} parent=47 // pred_region
        %p346 = scmp.lt.s32.totalorder %s22, 1
        %s347 = scalar_select %p346, %s22, 1
        %s348 = scalar_lea.vmem %s4, %s347
      $region56: #{tpu_custom_call.1} parent=47 // pred_fallthru
        _
    $region48: #{tpu_custom_call.1} parent=5 // pred_fallthru
      _
  $region6: #{tpu_custom_call.1} parent=0 // loop_footer
    %s15 = sadd.s32 1, %s11
  $region7: #{tpu_custom_call.1} parent=0 // loop_footer_branch
    %10 = sbr.rel target = $region3
  $region8: #{tpu_custom_call.1} parent=0 // loop_exit
    _

</llo_original>
